<compile_context>
chip_gen: v7x
topology: tpu7x:2x2x1
jax: 0.10.0
libtpu: 0.0.40
codegen_flags: <defaults>
</compile_context>

<pallas_src>
import functools

import jax
import jax.numpy as jnp
from jax import lax
from jax.experimental import pallas as pl
from jax.experimental.pallas import tpu as pltpu


def _pair(v):
    if isinstance(v, (tuple, list)):
        return (int(v[0]), int(v[1]))
    return (int(v), int(v))


def _round_up(x, m):
    return ((x + m - 1) // m) * m


# ---------------------------------------------------------------------------
# One-time probe of pltpu.roll's rotation direction.
# pltpu.roll is documented to match np.roll (out[i] = in[(i - shift) % n]); we
# verify that once at runtime (cached) so the kernel stays correct across jax
# versions.  Note: this makes the first eager call non-jittable; call dws_conv
# once eagerly before wrapping in jit if needed.
# ---------------------------------------------------------------------------
_ROLL_IS_NUMPY_STYLE = None


def _roll_is_numpy_style():
    global _ROLL_IS_NUMPY_STYLE
    if _ROLL_IS_NUMPY_STYLE is None:
        def probe_kernel(x_ref, o_ref):
            o_ref[...] = pltpu.roll(x_ref[...], 1, 1)

        x = lax.broadcasted_iota(jnp.float32, (8, 128), 1)
        out = pl.pallas_call(
            probe_kernel,
            out_shape=jax.ShapeDtypeStruct((8, 128), jnp.float32),
        )(x)
        # np.roll semantics: out[0] == x[127] == 127.
        _ROLL_IS_NUMPY_STYLE = bool(out[0, 0] == 127.0)
    return _ROLL_IS_NUMPY_STYLE


# ---------------------------------------------------------------------------
# Kernel: one batch element per grid step.
#   x_ref: (1, C_in_pad, F)          flattened padded image (lane axis = Hp*Wp,
#                                    zero tail to F), compute dtype (bf16/f32)
#   w_ref: (KH*KW, C_out, C_in_pad)  fused depthwise*pointwise weight
#   o_ref: (1, C_out, F)             stride-1 flattened output (garbage lanes
#                                    beyond the valid window cropped in wrapper)
# ---------------------------------------------------------------------------
def _dws_fused_kernel(x_ref, w_ref, o_ref, *, KH, KW, dh, dw, Wp, F, roll_np_style):
    x = x_ref[0]                                   # (C_in_pad, F)
    acc = None
    for kh in range(KH):
        for kw in range(KW):
            off = kh * dh * Wp + kw * dw           # static lane offset of this tap
            if off == 0:
                tap = x
            else:
                shift = (F - off) % F if roll_np_style else off
                tap = pltpu.roll(x, shift, 1)      # tap[:, p] == x[:, p + off] (XLU)
            # (C_out, C_in_pad) @ (C_in_pad, F) on the MXU, f32 accumulation.
            part = jnp.dot(w_ref[kh * KW + kw], tap,
                           preferred_element_type=jnp.float32)
            acc = part if acc is None else acc + part
    o_ref[0] = acc.astype(o_ref.dtype)


def dws_conv(x_nchw, dw_weight, pw_weight, stride, padding, dilation,
             compute_dtype=jnp.bfloat16):
    """x_nchw: (N, C_in, H, W); dw_weight: (C_in, 1, KH, KW);
    pw_weight: (C_out, C_in, 1, 1). Returns (N, C_out, H_out, W_out) in x dtype."""
    N, C_in, H, W = map(int, x_nchw.shape)
    KH, KW = int(dw_weight.shape[2]), int(dw_weight.shape[3])
    C_out = int(pw_weight.shape[0])
    s_h, s_w = _pair(stride)
    pad_h, pad_w = _pair(padding)
    dil_h, dil_w = _pair(dilation)

    Hp, Wp = H + 2 * pad_h, W + 2 * pad_w
    # Stride-1 "valid" output extents on the padded image.
    H1 = Hp - dil_h * (KH - 1)
    W1 = Wp - dil_w * (KW - 1)
    assert H1 >= 1 and W1 >= 1, "kernel window does not fit the padded input"
    # PyTorch Conv2d output extents.
    H_out = (H + 2 * pad_h - dil_h * (KH - 1) - 1) // s_h + 1
    W_out = (W + 2 * pad_w - dil_w * (KW - 1) - 1) // s_w + 1

    # Sublane-aligned channel count for the compute dtype (8 for f32, 16 for bf16).
    cbytes = jnp.dtype(compute_dtype).itemsize
    sub = 16 if cbytes == 2 else 8
    C_in_pad = _round_up(C_in, sub)
    KK = KH * KW

    # Lane-dense flattened image length (multiple of 128 -> unmasked vst).
    F = _round_up(Hp * Wp, 128)

    # ---- wrapper-side layout prep (one fused XLA pass, no kernel relayouts) ----
    x_pad = jnp.pad(x_nchw, ((0, 0), (0, C_in_pad - C_in),
                             (pad_h, pad_h), (pad_w, pad_w)))
    x_flat = x_pad.reshape(N, C_in_pad, Hp * Wp)
    x_flat = jnp.pad(x_flat, ((0, 0), (0, 0), (0, F - Hp * Wp)))
    x_flat = x_flat.astype(compute_dtype)

    # Fused weight Wf[kk, co, ci] = dw[ci, kh, kw] * pw[co, ci]; formed in f32,
    # cast to the compute dtype last.
    dw_k = jnp.transpose(dw_weight[:, 0, :, :], (1, 2, 0)).reshape(KK, C_in)
    pw_k = pw_weight[:, :, 0, 0]                                     # (C_out, C_in)
    w_fused = (dw_k.astype(jnp.float32)[:, None, :] *
               pw_k.astype(jnp.float32)[None, :, :])                 # (KK, C_out, C_in)
    w_fused = jnp.pad(w_fused, ((0, 0), (0, 0), (0, C_in_pad - C_in)))
    w_fused = w_fused.astype(compute_dtype)

    out_dtype = x_nchw.dtype
    obytes = jnp.dtype(out_dtype).itemsize

    # VMEM budget: double-buffered in/out blocks + weight + generous kernel-live
    # headroom; never below 32 MiB (raises v5e's 16 MiB scoped default).
    in_blk = C_in_pad * F * cbytes
    out_blk = C_out * F * obytes
    w_blk = KK * C_out * C_in_pad * cbytes
    live = 4 * C_in_pad * F * cbytes + 3 * C_out * F * 4
    vmem_limit = int(min(max(2 * in_blk + 2 * out_blk + 2 * w_blk + live + (4 << 20),
                             32 << 20), 100 << 20))

    cost = pl.CostEstimate(
        flops=2 * N * KK * C_out * C_in_pad * F,
        transcendentals=0,
        bytes_accessed=N * in_blk + w_blk + N * out_blk)

    kernel = functools.partial(
        _dws_fused_kernel, KH=KH, KW=KW, dh=dil_h, dw=dil_w, Wp=Wp, F=F,
        roll_np_style=_roll_is_numpy_style())

    out_flat = pl.pallas_call(
        kernel,
        out_shape=jax.ShapeDtypeStruct((N, C_out, F), out_dtype),
        grid=(N,),
        in_specs=[
            # Whole flattened image per batch element (largest possible lane tile).
            pl.BlockSpec((1, C_in_pad, F), lambda n: (n, 0, 0)),
            # Constant block index -> fetched once for the whole grid.
            pl.BlockSpec((KK, C_out, C_in_pad), lambda n: (0, 0, 0)),
        ],
        out_specs=pl.BlockSpec((1, C_out, F), lambda n: (n, 0, 0)),
        compiler_params=pltpu.CompilerParams(
            dimension_semantics=("parallel",),
            vmem_limit_bytes=vmem_limit),
        cost_estimate=cost,
    )(x_flat, w_fused)

    # Crop the stride-1 result and apply the conv stride (cheap XLA slices on a
    # small output; the lane-strided in-kernel slice path is gone).
    out = out_flat[:, :, :H1 * Wp].reshape(N, C_out, H1, Wp)[:, :, :, :W1]
    out = out[:, :, ::s_h, ::s_w]
    assert out.shape == (N, C_out, H_out, W_out), (out.shape, (N, C_out, H_out, W_out))
    return out


def _reference(x_nchw, dw_weight, pw_weight, stride, padding, dilation):
    """Pure-JAX reference matching nn.Conv2d semantics (depthwise then 1x1)."""
    C_in = x_nchw.shape[1]
    dn = lax.conv_dimension_numbers(x_nchw.shape, dw_weight.shape,
                                    ("NCHW", "OIHW", "NCHW"))
    y = lax.conv_general_dilated(
        x_nchw, dw_weight, window_strides=stride,
        padding=[(padding[0], padding[0]), (padding[1], padding[1])],
        rhs_dilation=dilation, dimension_numbers=dn,
        feature_group_count=C_in)
    dn2 = lax.conv_dimension_numbers(y.shape, pw_weight.shape,
                                     ("NCHW", "OIHW", "NCHW"))
    return lax.conv_general_dilated(
        y, pw_weight, window_strides=(1, 1), padding=[(0, 0), (0, 0)],
        dimension_numbers=dn2)


if __name__ == "__main__":
    key = jax.random.PRNGKey(0)
    k_x, k_dw, k_pw = jax.random.split(key, 3)

    N, C_in, H, W = 2, 4, 16, 16
    C_out, K = 8, 3
    x = jax.random.normal(k_x, (N, C_in, H, W), dtype=jnp.float32)
    dw_w = jax.random.normal(k_dw, (C_in, 1, K, K), dtype=jnp.float32) * 0.1
    pw_w = jax.random.normal(k_pw, (C_out, C_in, 1, 1), dtype=jnp.float32) * 0.1

    # Config A: DARTS dil-conv (kernel 3, stride 1, padding 2, dilation 2),
    # default bf16 MXU path (loosened tolerance for bf16 operands).
    s, p, d = (1, 1), (2, 2), (2, 2)
    out_bf16 = jax.block_until_ready(dws_conv(x, dw_w, pw_w, s, p, d))
    ref = _reference(x, dw_w, pw_w, s, p, d)
    assert out_bf16.shape == ref.shape, (out_bf16.shape, ref.shape)
    assert jnp.allclose(out_bf16, ref, atol=2e-2, rtol=2e-2), float(
        jnp.max(jnp.abs(out_bf16 - ref)))

    # Same config, f32 compute path: validates the roll/fused-weight logic exactly.
    out_f32 = jax.block_until_ready(
        dws_conv(x, dw_w, pw_w, s, p, d, compute_dtype=jnp.float32))
    assert jnp.allclose(out_f32, ref, atol=1e-4, rtol=1e-4), float(
        jnp.max(jnp.abs(out_f32 - ref)))

    # Config B: strided 3x3 (stride 2, padding 1, dilation 1) -- exercises the
    # wrapper-side stride subsampling.
    s2, p2, d2 = (2, 2), (1, 1), (1, 1)
    out2 = jax.block_until_ready(dws_conv(x, dw_w, pw_w, s2, p2, d2))
    ref2 = _reference(x, dw_w, pw_w, s2, p2, d2)
    assert out2.shape == ref2.shape, (out2.shape, ref2.shape)
    assert jnp.allclose(out2, ref2, atol=2e-2, rtol=2e-2), float(
        jnp.max(jnp.abs(out2 - ref2)))

    print("KERNEL_OK")
</pallas_src>

<mosaic_0001>
module attributes {stable_mosaic.version = 11 : i64} {
  func.func @probe_kernel(%arg0: memref<8x128xf32, #tpu.memory_space<vmem>>, %arg1: memref<8x128xf32, #tpu.memory_space<vmem>>) attributes {dimension_semantics = [], scalar_prefetch = 0 : i64, scratch_operands = 0 : i64, tpu.core_type = #tpu.core_type<tc>} {
    %c0 = arith.constant 0 : index
    %c0_0 = arith.constant 0 : index
    %0 = vector.load %arg0[%c0, %c0_0] : memref<8x128xf32, #tpu.memory_space<vmem>>, vector<8x128xf32>
    %c1_i32 = arith.constant 1 : i32
    %1 = tpu.dynamic_rotate %0 by %c1_i32 dim 1 : vector<8x128xf32>, i32 -> vector<8x128xf32>
    %c0_1 = arith.constant 0 : index
    %c0_2 = arith.constant 0 : index
    %2 = vector.load %arg1[%c0_1, %c0_2] : memref<8x128xf32, #tpu.memory_space<vmem>>, vector<8x128xf32>
    tpu.vector_store %arg1[%c0_1, %c0_2], %1 {strides = array<i32>} : memref<8x128xf32, #tpu.memory_space<vmem>>, vector<8x128xf32>,
    return
  }
}

</mosaic_0001>

<llo_original>
// kernel: tpu_custom_call.1
$region0: #{tpu_custom_call.1}
  #allocation0 [shape = 'u32[]', space=smem, size = 0x4, offset = 0x4, fixed_abs, tag = 'smem constant byte address 0x4 - core index']
  #allocation1 [shape = 'u32[144,128]{1,0:T(1,128)}', space=vmem, size = 0x12000, scoped, tag = 'internal scratch']
  %s0 = inlined_call_operand.hbm [shape: f32[8,128], index: 0, kind: input, shape index: {}]
  %s1 = inlined_call_operand.hbm [shape: f32[8,128], index: 1, kind: output, shape index: {}]
  %s2 = sld [smem:[#allocation0]]
  $region18: #{tpu_custom_call.1} parent=0
    _
  %s4 = ssub.s32 1, %s2
  %s5 = scalar_select 0, %s4, %s2
  $region1: #{tpu_custom_call.1} parent=0
    #allocation2 [shape = 'u8[4096]{0}', space=vmem, size = 0x1000, scoped, tag = 'input window, operand 0, single buffered']
    #allocation3 [shape = 's32[1]{0}', space=sflag, size = 0x4, scoped, tag = 'scoped memory for tpu_custom_call.1']
    #allocation4 [shape = 's32[1]{0}', space=sflag, size = 0x4, scoped, tag = 'scoped memory for tpu_custom_call.1']
    #allocation5 [shape = 'u8[4096]{0}', space=vmem, size = 0x1000, scoped, tag = 'output window, operand 0, single buffered']
    %6 = vsyncpa [#allocation3], 0
    %7 = vsyncpa [#allocation4], 0
    // Predicated region
    $region2: #{tpu_custom_call.1} parent=1 // pred_check
      _
    $region3: #{tpu_custom_call.1} parent=1 // pred_check_branch
      %9 = sbr.rel (0) target = $region5
    $region4: #{tpu_custom_call.1} parent=1 // pred_region
      %s11 = ssub.s32 128, 128
      %12 = vsyncadd [#allocation3], %s11
      %s14 = sshll.u32 [#allocation2], 4
      %s15 = int_to_ptr.vmem [resolvable:$true] %s14
      %17 = dma.hbm_to_vmem [thread:$0]  %s0, 128, %s15, [#allocation3]
    $region5: #{tpu_custom_call.1} parent=1 // pred_fallthru
      _
    // Predicated region
    $region6: #{tpu_custom_call.1} parent=1 // pred_check
      _
    $region7: #{tpu_custom_call.1} parent=1 // pred_check_branch
      %19 = sbr.rel (0) target = $region9
    $region8: #{tpu_custom_call.1} parent=1 // pred_region
      %20 = dma.done [#allocation3], 128
    $region9: #{tpu_custom_call.1} parent=1 // pred_fallthru
      _
    %v21 = vld [vmem:[#allocation2] sm:$0xff]
    %22 = vrot.lane.b32.xlu0 %v21, 1
    %v23 = vpop.permute.xlu0 %22
    %24 = vst [vmem:[#allocation5] sm:$0xff] %v23
    // Predicated region
    $region10: #{tpu_custom_call.1} parent=1 // pred_check
      _
    $region11: #{tpu_custom_call.1} parent=1 // pred_check_branch
      %26 = sbr.rel (0) target = $region13
    $region12: #{tpu_custom_call.1} parent=1 // pred_region
      %s28 = ssub.s32 128, 128
      %29 = vsyncadd [#allocation4], %s28
      %s31 = sshll.u32 [#allocation5], 4
      %s32 = int_to_ptr.vmem [resolvable:$true] %s31
      %34 = dma.vmem_to_hbm [thread:$0]  %s32, 128, %s1, [#allocation4]
    $region13: #{tpu_custom_call.1} parent=1 // pred_fallthru
      _
    // Predicated region
    $region14: #{tpu_custom_call.1} parent=1 // pred_check
      _
    $region15: #{tpu_custom_call.1} parent=1 // pred_check_branch
      %36 = sbr.rel (0) target = $region17
    $region16: #{tpu_custom_call.1} parent=1 // pred_region
      %37 = dma.done [#allocation4], 128
    $region17: #{tpu_custom_call.1} parent=1 // pred_fallthru
      _
    %38 = vsyncpa [#allocation3], 1
    %39 = vsyncpa [#allocation4], 1

</llo_original>
